<compile_context>
chip_gen: v7x
topology: tpu7x:2x2x1
jax: 0.10.0
libtpu: 0.0.40
codegen_flags: <defaults>
</compile_context>

<pallas_src>
import functools

import jax
import jax.numpy as jnp
from jax import lax
from jax.experimental import pallas as pl
from jax.experimental.pallas import tpu as pltpu

_NEG_BIG = -1e30   # finite "-inf": identical softmax for normal rows, no NaN for all-masked rows
_LN_EPS = 1e-5     # torch nn.LayerNorm default


# -----------------------------------------------------------------------------
# Prologue kernel: per-batch dep / vec caches (runs once per (batch, row-tile)).
# -----------------------------------------------------------------------------
def _cache_kernel(x_ref, wd_ref, bd_ref, wbi_ref, wv_ref, bv_ref,
                  d_out_ref, v_out_ref):
    xb = x_ref[0].astype(jnp.bfloat16)                                      # (TL, D)
    d = jnp.maximum(
        jnp.dot(xb, wd_ref[...], preferred_element_type=jnp.float32)
        + bd_ref[...], 0.0)                                                 # (TL, A) f32
    # d_cache tile = (W_bi / sqrt(din)) @ D^T, stored (A, TL): folds the
    # bilinear weight + scale into the cache and pre-transposes it so the main
    # kernel's score is a plain (TQ, A) @ (A, L) MXU matmul.
    d_out_ref[0] = lax.dot_general(
        wbi_ref[...], d.astype(jnp.bfloat16),
        dimension_numbers=(((1,), (1,)), ((), ())),
        preferred_element_type=jnp.float32).astype(jnp.bfloat16)            # (A, TL)
    v = jnp.maximum(
        jnp.dot(xb, wv_ref[...], preferred_element_type=jnp.float32)
        + bv_ref[...], 0.0)
    v_out_ref[0] = v.astype(jnp.bfloat16)                                   # (TL, A)


# -----------------------------------------------------------------------------
# Main kernel: per-(batch, query-tile) head MLP, scores, softmax, value sum,
# projection, residual + LayerNorm.
# -----------------------------------------------------------------------------
def _biaffine_kernel(x_ref, mask_ref, d_ref, v_ref,
                     wh_ref, bh_ref, wproj_ref, gamma_ref, beta_ref,
                     s_out_ref, y_out_ref, *, eps):
    x_q = x_ref[0]                                                          # (TQ, D) f32

    # Head MLP + bilinear scores (W_bi and 1/sqrt(din) already live in d_ref).
    h = jnp.maximum(
        jnp.dot(x_q.astype(jnp.bfloat16), wh_ref[...],
                preferred_element_type=jnp.float32) + bh_ref[...], 0.0)     # (TQ, A)
    s = jnp.dot(h.astype(jnp.bfloat16), d_ref[0],
                preferred_element_type=jnp.float32)                         # (TQ, L)

    # Masked softmax over the key axis (dim=2 of the full tensor).
    s = jnp.where(mask_ref[0] != 0, _NEG_BIG, s)
    s_max = jnp.max(s, axis=-1, keepdims=True)
    e = jnp.exp(s - s_max)
    p = e / jnp.sum(e, axis=-1, keepdims=True)   # exact divide: p is a stored output

    # Attention-weighted value sum + output projection.
    y_arc = jnp.dot(p.astype(jnp.bfloat16), v_ref[0],
                    preferred_element_type=jnp.float32)                     # (TQ, A)
    y_arc = jnp.dot(y_arc.astype(jnp.bfloat16), wproj_ref[...],
                    preferred_element_type=jnp.float32)                     # (TQ, D)

    # Residual + LayerNorm(din), all f32.
    z = x_q + y_arc
    mu = jnp.mean(z, axis=-1, keepdims=True)
    var = jnp.mean((z - mu) * (z - mu), axis=-1, keepdims=True)
    y = (z - mu) * lax.rsqrt(var + eps) * gamma_ref[...] + beta_ref[...]

    s_out_ref[0] = p
    y_out_ref[0] = y.astype(y_out_ref.dtype)


# -----------------------------------------------------------------------------
# Wrapper.
# -----------------------------------------------------------------------------
def _round_up(x, m):
    return (x + m - 1) // m * m


def _pick_row_tile(L):
    # Multiples of 32 keep both f32 (8,128) and int8 (32,128) sublane tilings
    # aligned; fall back to the full length (single tile) otherwise.
    # TODO(synk): pick 128 on v5e (128-wide MXU) vs 256 on v6e/v7x once
    # pltpu.get_tpu_info() exposes MXU dims in a stable way.
    for cand in (256, 128, 64, 32):
        if L % cand == 0:
            return cand
    return L


def _vmem_limit_bytes():
    # ~75% of physical VMEM: ~48 MiB on v7x (64 MiB), ~96 MiB on v5e/v6e (128 MiB).
    try:
        cap = int(pltpu.get_tpu_info().vmem_capacity_bytes)
        return int(min(100 * 1024 * 1024, cap * 3 // 4))
    except Exception:
        return 48 * 1024 * 1024


def biaffine_forward(x, mask, params, *, din):
    """x: (B, L, din) f32; mask: (B, L, L), nonzero = masked (torch masked_fill)."""
    B, L, D = x.shape
    assert D == din
    dim_arc = params["W_head"].shape[1]
    fac = float(din) ** 0.5

    tile = _pick_row_tile(L)
    nt = L // tile
    vmem_limit = _vmem_limit_bytes()

    # dim_arc padded to a lane-aligned multiple of 128; zero padding is a
    # mathematical no-op (padded MLP columns are relu(0+0)=0, padded W_bi rows
    # and W_proj rows are 0, so scores / outputs are unchanged).
    ap = _round_up(max(dim_arc, 128), 128)
    pad_a = ap - dim_arc

    def pad_cols(w):   # (..., dim_arc) -> (..., ap)
        return jnp.pad(w, ((0, 0), (0, pad_a)))

    def pad_rows(w):   # (dim_arc, ...) -> (ap, ...)
        return jnp.pad(w, ((0, pad_a), (0, 0)))

    # One-time parameter prep: bf16 matmul weights, 1/sqrt(din) folded into W_bi.
    w_head = pad_cols(params["W_head"]).astype(jnp.bfloat16)                # (D, ap)
    b_head = pad_cols(params["b_head"])                                     # (1, ap) f32
    w_dep = pad_cols(params["W_dep"]).astype(jnp.bfloat16)
    b_dep = pad_cols(params["b_dep"])
    w_vec = pad_cols(params["W_vec"]).astype(jnp.bfloat16)
    b_vec = pad_cols(params["b_vec"])
    w_bi = pad_rows(pad_cols(params["W_bi"] * (1.0 / fac))).astype(jnp.bfloat16)   # (ap, ap)
    w_proj = pad_rows(params["W_proj"]).astype(jnp.bfloat16)                # (ap, D)
    mask_i8 = (mask != 0).astype(jnp.int8)   # binarized: no truncation hazard, 4x less HBM than i32

    # Constant-index blocks (weights / biases / LN params): DMA'd once, reused.
    # TODO(synk): single-buffer these with pipeline_mode=pl.Buffered(1) once
    # that is supported for top-level TPU grids (saves one VMEM copy each).
    const2 = lambda shape: pl.BlockSpec(shape, lambda b, t: (0, 0))

    # ---- Prologue: per-batch dep / vec caches -------------------------------
    d_cache, v_cache = pl.pallas_call(
        _cache_kernel,
        grid_spec=pltpu.PrefetchScalarGridSpec(
            num_scalar_prefetch=0,
            grid=(B, nt),
            in_specs=[
                pl.BlockSpec((1, tile, D), lambda b, t: (b, t, 0)),     # X row tile
                const2((D, ap)),                                        # W_dep (bf16)
                const2((1, ap)),                                        # b_dep
                const2((ap, ap)),                                       # W_bi/sqrt(din) (bf16)
                const2((D, ap)),                                        # W_vec (bf16)
                const2((1, ap)),                                        # b_vec
            ],
            out_specs=[
                pl.BlockSpec((1, ap, tile), lambda b, t: (b, 0, t)),    # d_cache (pre-transposed)
                pl.BlockSpec((1, tile, ap), lambda b, t: (b, t, 0)),    # v_cache
            ],
        ),
        out_shape=(
            jax.ShapeDtypeStruct((B, ap, L), jnp.bfloat16),
            jax.ShapeDtypeStruct((B, L, ap), jnp.bfloat16),
        ),
        compiler_params=pltpu.CompilerParams(
            dimension_semantics=("parallel", "parallel"),
            vmem_limit_bytes=vmem_limit,
        ),
    )(x, w_dep, b_dep, w_bi, w_vec, b_vec)

    # ---- Main kernel: scores / softmax / value sum / LayerNorm --------------
    kernel = functools.partial(_biaffine_kernel, eps=_LN_EPS)
    s_arc, y = pl.pallas_call(
        kernel,
        grid_spec=pltpu.PrefetchScalarGridSpec(
            num_scalar_prefetch=0,
            grid=(B, nt),
            in_specs=[
                pl.BlockSpec((1, tile, D), lambda b, q: (b, q, 0)),     # X row tile
                pl.BlockSpec((1, tile, L), lambda b, q: (b, q, 0)),     # mask row tile (int8)
                pl.BlockSpec((1, ap, L), lambda b, q: (b, 0, 0)),       # d_cache (bf16)
                pl.BlockSpec((1, L, ap), lambda b, q: (b, 0, 0)),       # v_cache (bf16)
                const2((D, ap)),                                        # W_head (bf16)
                const2((1, ap)),                                        # b_head
                const2((ap, D)),                                        # W_proj (bf16)
                const2((1, D)),                                         # ln gamma
                const2((1, D)),                                         # ln beta
            ],
            out_specs=[
                pl.BlockSpec((1, tile, L), lambda b, q: (b, q, 0)),     # S_arc (post-softmax)
                pl.BlockSpec((1, tile, D), lambda b, q: (b, q, 0)),     # Y
            ],
        ),
        out_shape=(
            # TODO(synk): emit S_arc as bf16 if the consumer tolerates it
            # (halves the dominant HBM write on v5e/v6e); f32 kept for parity.
            jax.ShapeDtypeStruct((B, L, L), jnp.float32),
            jax.ShapeDtypeStruct((B, L, D), jnp.float32),
        ),
        compiler_params=pltpu.CompilerParams(
            dimension_semantics=("parallel", "parallel"),
            vmem_limit_bytes=vmem_limit,
        ),
    )(x, mask_i8, d_cache, v_cache, w_head, b_head, w_proj,
      params["ln_gamma"], params["ln_beta"])
    return s_arc, y


def init_params(key, din, dim_arc):
    ks = jax.random.split(key, 6)
    scale_in = 1.0 / (din ** 0.5)
    scale_arc = 1.0 / (dim_arc ** 0.5)
    return {
        "W_head": jax.random.normal(ks[0], (din, dim_arc), jnp.float32) * scale_in,
        "b_head": jnp.zeros((1, dim_arc), jnp.float32),
        "W_dep": jax.random.normal(ks[1], (din, dim_arc), jnp.float32) * scale_in,
        "b_dep": jnp.zeros((1, dim_arc), jnp.float32),
        "W_bi": jax.random.normal(ks[2], (dim_arc, dim_arc), jnp.float32) * scale_arc,
        "W_vec": jax.random.normal(ks[3], (din, dim_arc), jnp.float32) * scale_in,
        "b_vec": jnp.zeros((1, dim_arc), jnp.float32),
        # nn.Linear(dim_arc, din, False): stored already transposed as (dim_arc, din)
        "W_proj": jax.random.normal(ks[4], (dim_arc, din), jnp.float32) * scale_arc,
        "ln_gamma": jnp.ones((1, din), jnp.float32),
        "ln_beta": jnp.zeros((1, din), jnp.float32),
    }
    # TODO(synk): dropout inside Arc / MLP is identity here (eval-mode forward).


def _reference(x, mask_bool, params, din):
    """Pure-JAX f32 reference with the same eval-mode semantics."""
    fac = float(din) ** 0.5
    h = jax.nn.relu(x @ params["W_head"] + params["b_head"])
    d = jax.nn.relu(x @ params["W_dep"] + params["b_dep"])
    s = jnp.einsum("bia,ac,bjc->bij", h, params["W_bi"], d) / fac
    s = jnp.where(mask_bool, _NEG_BIG, s)
    p = jax.nn.softmax(s, axis=2)
    v = jax.nn.relu(x @ params["W_vec"] + params["b_vec"])
    y_arc = (p @ v) @ params["W_proj"]
    z = x + y_arc
    mu = z.mean(-1, keepdims=True)
    var = ((z - mu) ** 2).mean(-1, keepdims=True)
    y = (z - mu) / jnp.sqrt(var + _LN_EPS) * params["ln_gamma"] + params["ln_beta"]
    return p, y


if __name__ == "__main__":
    B, L, DIN, DIM_ARC = 2, 8, 32, 16
    key = jax.random.PRNGKey(0)
    kx, km, kp = jax.random.split(key, 3)

    x = jax.random.normal(kx, (B, L, DIN), jnp.float32)
    # boolean mask (nonzero = masked); keep the diagonal unmasked so every row
    # has at least one valid key.
    mask_bool = jax.random.bernoulli(km, 0.3, (B, L, L))
    mask_bool = mask_bool & (~jnp.eye(L, dtype=bool)[None])
    mask = mask_bool.astype(jnp.int32)

    params = init_params(kp, DIN, DIM_ARC)

    s_arc, y = biaffine_forward(x, mask, params, din=DIN)
    jax.block_until_ready((s_arc, y))

    assert s_arc.shape == (B, L, L) and y.shape == (B, L, DIN)
    assert bool(jnp.isfinite(s_arc).all()) and bool(jnp.isfinite(y).all())
    # Returned softmax rows sum to 1 (exact divide in the kernel).
    assert bool(jnp.allclose(s_arc.sum(-1), 1.0, atol=1e-3))

    # Loose check against a pure-JAX f32 reference (kernel matmuls are bf16).
    s_ref, y_ref = _reference(x, mask_bool, params, DIN)
    assert bool(jnp.allclose(s_arc, s_ref, atol=5e-2)), "S_arc mismatch vs reference"
    assert bool(jnp.allclose(y, y_ref, atol=2e-1)), "Y mismatch vs reference"

    print("KERNEL_OK")
</pallas_src>

<mosaic_0001>
module attributes {stable_mosaic.version = 11 : i64} {
  func.func @_cache_kernel(%arg0: i32, %arg1: i32, %arg2: memref<1x8x32xf32, #tpu.memory_space<vmem>>, %arg3: memref<32x128xbf16, #tpu.memory_space<vmem>>, %arg4: memref<1x128xf32, #tpu.memory_space<vmem>>, %arg5: memref<128x128xbf16, #tpu.memory_space<vmem>>, %arg6: memref<32x128xbf16, #tpu.memory_space<vmem>>, %arg7: memref<1x128xf32, #tpu.memory_space<vmem>>, %arg8: memref<1x128x8xbf16, #tpu.memory_space<vmem>>, %arg9: memref<1x8x128xbf16, #tpu.memory_space<vmem>>) attributes {dimension_semantics = [#tpu.dimension_semantics<parallel>, #tpu.dimension_semantics<parallel>], iteration_bounds = array<i64: 2, 1>, scalar_prefetch = 0 : i64, scratch_operands = 0 : i64, tpu.core_type = #tpu.core_type<tc>, window_params = [{transform_indices = @transform_0, window_bounds = array<i64: 1, 8, 32>}, {pipeline_mode = #tpu.pipeline_mode<synchronous>, transform_indices = @transform_1, window_bounds = array<i64: 32, 128>}, {pipeline_mode = #tpu.pipeline_mode<synchronous>, transform_indices = @transform_2, window_bounds = array<i64: 1, 128>}, {pipeline_mode = #tpu.pipeline_mode<synchronous>, transform_indices = @transform_3, window_bounds = array<i64: 128, 128>}, {pipeline_mode = #tpu.pipeline_mode<synchronous>, transform_indices = @transform_4, window_bounds = array<i64: 32, 128>}, {pipeline_mode = #tpu.pipeline_mode<synchronous>, transform_indices = @transform_5, window_bounds = array<i64: 1, 128>}, {transform_indices = @transform_6, window_bounds = array<i64: 1, 128, 8>}, {transform_indices = @transform_7, window_bounds = array<i64: 1, 8, 128>}]} {
    %c0 = arith.constant 0 : index
    %c0_0 = arith.constant 0 : index
    %c0_1 = arith.constant 0 : index
    %0 = vector.load %arg2[%c0, %c0_0, %c0_1] : memref<1x8x32xf32, #tpu.memory_space<vmem>>, vector<1x8x32xf32>
    %1 = vector.shape_cast %0 : vector<1x8x32xf32> to vector<8x32xf32>
    %2 = arith.truncf %1 : vector<8x32xf32> to vector<8x32xbf16>
    %c0_2 = arith.constant 0 : index
    %c0_3 = arith.constant 0 : index
    %3 = vector.load %arg3[%c0_2, %c0_3] : memref<32x128xbf16, #tpu.memory_space<vmem>>, vector<32x128xbf16>
    %cst = arith.constant dense<0.000000e+00> : vector<8x128xf32>
    %4 = tpu.matmul %2, %3, %cst {dimension_numbers = #tpu.dot_dimension_numbers<[1], [0], [0], [1], [0, 0, 1, 1], [], []>} : vector<8x32xbf16>, vector<32x128xbf16>, vector<8x128xf32> -> vector<8x128xf32>
    %c0_4 = arith.constant 0 : index
    %c0_5 = arith.constant 0 : index
    %5 = vector.load %arg4[%c0_4, %c0_5] : memref<1x128xf32, #tpu.memory_space<vmem>>, vector<1x128xf32>
    %6 = vector.broadcast %5 : vector<1x128xf32> to vector<8x128xf32>
    %7 = arith.addf %4, %6 : vector<8x128xf32>
    %cst_6 = arith.constant 0.000000e+00 : f32
    %8 = vector.broadcast %cst_6 : f32 to vector<8x128xf32>
    %9 = arith.maximumf %7, %8 : vector<8x128xf32>
    %c0_7 = arith.constant 0 : index
    %c0_8 = arith.constant 0 : index
    %10 = vector.load %arg5[%c0_7, %c0_8] : memref<128x128xbf16, #tpu.memory_space<vmem>>, vector<128x128xbf16>
    %11 = arith.truncf %9 : vector<8x128xf32> to vector<8x128xbf16>
    %cst_9 = arith.constant dense<0.000000e+00> : vector<128x8xf32>
    %12 = tpu.matmul %10, %11, %cst_9 {dimension_numbers = #tpu.dot_dimension_numbers<[1], [1], [0], [0], [0, 0, 1, 0], [], []>} : vector<128x128xbf16>, vector<8x128xbf16>, vector<128x8xf32> -> vector<128x8xf32>
    %13 = arith.truncf %12 : vector<128x8xf32> to vector<128x8xbf16>
    %c0_10 = arith.constant 0 : index
    %c0_11 = arith.constant 0 : index
    %c0_12 = arith.constant 0 : index
    %14 = vector.load %arg8[%c0_10, %c0_11, %c0_12] : memref<1x128x8xbf16, #tpu.memory_space<vmem>>, vector<1x128x8xbf16>
    %15 = vector.shape_cast %14 : vector<1x128x8xbf16> to vector<128x8xbf16>
    %16 = vector.shape_cast %13 : vector<128x8xbf16> to vector<1x128x8xbf16>
    tpu.vector_store %arg8[%c0_10, %c0_11, %c0_12], %16 {strides = array<i32>} : memref<1x128x8xbf16, #tpu.memory_space<vmem>>, vector<1x128x8xbf16>,
    %c0_13 = arith.constant 0 : index
    %c0_14 = arith.constant 0 : index
    %17 = vector.load %arg6[%c0_13, %c0_14] : memref<32x128xbf16, #tpu.memory_space<vmem>>, vector<32x128xbf16>
    %cst_15 = arith.constant dense<0.000000e+00> : vector<8x128xf32>
    %18 = tpu.matmul %2, %17, %cst_15 {dimension_numbers = #tpu.dot_dimension_numbers<[1], [0], [0], [1], [0, 0, 1, 1], [], []>} : vector<8x32xbf16>, vector<32x128xbf16>, vector<8x128xf32> -> vector<8x128xf32>
    %c0_16 = arith.constant 0 : index
    %c0_17 = arith.constant 0 : index
    %19 = vector.load %arg7[%c0_16, %c0_17] : memref<1x128xf32, #tpu.memory_space<vmem>>, vector<1x128xf32>
    %20 = vector.broadcast %19 : vector<1x128xf32> to vector<8x128xf32>
    %21 = arith.addf %18, %20 : vector<8x128xf32>
    %cst_18 = arith.constant 0.000000e+00 : f32
    %22 = vector.broadcast %cst_18 : f32 to vector<8x128xf32>
    %23 = arith.maximumf %21, %22 : vector<8x128xf32>
    %24 = arith.truncf %23 : vector<8x128xf32> to vector<8x128xbf16>
    %c0_19 = arith.constant 0 : index
    %c0_20 = arith.constant 0 : index
    %c0_21 = arith.constant 0 : index
    %25 = vector.load %arg9[%c0_19, %c0_20, %c0_21] : memref<1x8x128xbf16, #tpu.memory_space<vmem>>, vector<1x8x128xbf16>
    %26 = vector.shape_cast %25 : vector<1x8x128xbf16> to vector<8x128xbf16>
    %27 = vector.shape_cast %24 : vector<8x128xbf16> to vector<1x8x128xbf16>
    tpu.vector_store %arg9[%c0_19, %c0_20, %c0_21], %27 {strides = array<i32>} : memref<1x8x128xbf16, #tpu.memory_space<vmem>>, vector<1x8x128xbf16>,
    return
  }
  func.func @transform_0(%arg0: i32, %arg1: i32) -> (i32, i32, i32) {
    %c0_i32 = arith.constant 0 : i32
    %c0_i32_0 = arith.constant 0 : i32
    return %arg0, %arg1, %c0_i32 : i32, i32, i32
  }
  func.func @transform_1(%arg0: i32, %arg1: i32) -> (i32, i32) {
    %c0_i32 = arith.constant 0 : i32
    %c0_i32_0 = arith.constant 0 : i32
    %c0_i32_1 = arith.constant 0 : i32
    return %c0_i32, %c0_i32_0 : i32, i32
  }
  func.func @transform_2(%arg0: i32, %arg1: i32) -> (i32, i32) {
    %c0_i32 = arith.constant 0 : i32
    %c0_i32_0 = arith.constant 0 : i32
    %c0_i32_1 = arith.constant 0 : i32
    return %c0_i32, %c0_i32_0 : i32, i32
  }
  func.func @transform_3(%arg0: i32, %arg1: i32) -> (i32, i32) {
    %c0_i32 = arith.constant 0 : i32
    %c0_i32_0 = arith.constant 0 : i32
    %c0_i32_1 = arith.constant 0 : i32
    return %c0_i32, %c0_i32_0 : i32, i32
  }
  func.func @transform_4(%arg0: i32, %arg1: i32) -> (i32, i32) {
    %c0_i32 = arith.constant 0 : i32
    %c0_i32_0 = arith.constant 0 : i32
    %c0_i32_1 = arith.constant 0 : i32
    return %c0_i32, %c0_i32_0 : i32, i32
  }
  func.func @transform_5(%arg0: i32, %arg1: i32) -> (i32, i32) {
    %c0_i32 = arith.constant 0 : i32
    %c0_i32_0 = arith.constant 0 : i32
    %c0_i32_1 = arith.constant 0 : i32
    return %c0_i32, %c0_i32_0 : i32, i32
  }
  func.func @transform_6(%arg0: i32, %arg1: i32) -> (i32, i32, i32) {
    %c0_i32 = arith.constant 0 : i32
    %c0_i32_0 = arith.constant 0 : i32
    return %arg0, %c0_i32, %arg1 : i32, i32, i32
  }
  func.func @transform_7(%arg0: i32, %arg1: i32) -> (i32, i32, i32) {
    %c0_i32 = arith.constant 0 : i32
    %c0_i32_0 = arith.constant 0 : i32
    return %arg0, %arg1, %c0_i32 : i32, i32, i32
  }
}

</mosaic_0001>

<llo_original>
// kernel: tpu_custom_call.1
$region0: #{tpu_custom_call.1}
  #allocation0 [shape = 'u32[]', space=smem, size = 0x4, offset = 0x4, fixed_abs, tag = 'smem constant byte address 0x4 - core index']
  #allocation1 [shape = 'u32[144,128]{1,0:T(1,128)}', space=vmem, size = 0x12000, scoped, tag = 'internal scratch']
  %s0 = inlined_call_operand.hbm [shape: f32[2,8,32], index: 0, kind: input, shape index: {}]
  %s1 = inlined_call_operand.hbm [shape: bf16[32,128], index: 1, kind: input, shape index: {}]
  %s2 = inlined_call_operand.vmem [shape: f32[1,128], index: 2, kind: input, shape index: {}]
  %s3 = inlined_call_operand.hbm [shape: bf16[128,128], index: 3, kind: input, shape index: {}]
  %s4 = inlined_call_operand.hbm [shape: bf16[32,128], index: 4, kind: input, shape index: {}]
  %s5 = inlined_call_operand.vmem [shape: f32[1,128], index: 5, kind: input, shape index: {}]
  %s6 = inlined_call_operand.vmem [shape: bf16[2,128,8], index: 6, kind: output, shape index: {0}]
  %s7 = inlined_call_operand.hbm [shape: bf16[2,8,128], index: 7, kind: output, shape index: {1}]
  %8 = xla_tuple %s6, %s7
  %s9 = sld [smem:[#allocation0]]
  $region81: #{tpu_custom_call.1} parent=0
    _
  %s11 = ssub.s32 1, %s9
  %s12 = scalar_select 0, %s11, %s9
  $region1: #{tpu_custom_call.1} parent=0
    #allocation2 [shape = 'u8[8192]{0}', space=vmem, size = 0x2000, scoped, tag = 'input window, operand 0']
    #allocation3 [shape = 's32[2]{0}', space=sflag, size = 0x8, scoped, tag = 'scoped memory for tpu_custom_call.1']
    #allocation4 [shape = 's32[2]{0}', space=sflag, size = 0x8, scoped, tag = 'scoped memory for tpu_custom_call.1']
    #allocation5 [shape = 'u8[8192]{0}', space=vmem, size = 0x2000, scoped, tag = 'input window, operand 1, single buffered']
    #allocation6 [shape = 's32[1]{0}', space=sflag, size = 0x4, scoped, tag = 'scoped memory for tpu_custom_call.1']
    #allocation7 [shape = 'u8[32768]{0}', space=vmem, size = 0x8000, scoped, tag = 'input window, operand 3, single buffered']
    #allocation8 [shape = 'u8[8192]{0}', space=vmem, size = 0x2000, scoped, tag = 'input window, operand 4, single buffered']
    #allocation9 [shape = 's32[1]{0}', space=sflag, size = 0x4, scoped, tag = 'scoped memory for tpu_custom_call.1']
    #allocation10 [shape = 'u8[4096]{0}', space=vmem, size = 0x1000, scoped, tag = 'output window, operand 1']
    %13 = vsyncpa [#allocation3], 0
    %s14 = scalar_lea.sflag [#allocation3], 1
    %15 = vsyncpa %s14, 0
    %16 = vsyncpa [#allocation6], 0
    %17 = vsyncpa [#allocation9], 0
    %18 = vsyncpa [#allocation4], 0
    %s19 = scalar_lea.sflag [#allocation4], 1
    %20 = vsyncpa %s19, 0
    loop: start=0, step=1, limit=4
    $region2: #{tpu_custom_call.1} parent=1 // loop_pre_header
      _
    $region3: #{tpu_custom_call.1} parent=1 // loop_header
      %s22 = sphi 0, %s26
      %p23 = scmp.ge.s32.totalorder %s22, 4
      %s29 = sphi 0, %s41
      %s30 = sphi 0, %s37
      %s31 = sphi 0, %s29
      %s32 = sphi 0, %s30
      %s33 = sphi 0, %s31
      %s34 = sphi 0, %s32
      %s46 = sphi 0, %s48
      %s49 = sphi 0, %s46
      %s50 = sphi 0, %s49
      %s66 = sphi 0, %s50
      %s70 = sphi 0, %s70
      %s72 = sphi 0, %s70
      %s73 = sphi 0, %s72
      %s87 = sphi 0, %s73
      %s91 = sphi 0, %s91
      %s93 = sphi 0, %s91
      %s94 = sphi 0, %s93
      %s108 = sphi 0, %s94
      %s112 = sphi 0, %s112
      %s114 = sphi 0, %s112
      %s115 = sphi 0, %s114
      %s129 = sphi 0, %s115
      %s133 = sphi 0, %s133
      %s135 = sphi 0, %s133
      %s136 = sphi 0, %s135
      %s150 = sphi 0, %s136
      %s154 = sphi 0, %s154
      %s156 = sphi 0, %s154
      %s157 = sphi 0, %s156
      %s171 = sphi 0, %s157
      %s179 = sphi 0, %s181
      %s182 = sphi 0, %s179
      %s183 = sphi 0, %s182
      %s199 = sphi 0, %s183
      %s207 = sphi 0, %s209
      %s210 = sphi 0, %s207
      %s211 = sphi 0, %s210
      %s227 = sphi 0, %s211
    $region4: #{tpu_custom_call.1} parent=1 // loop_header_branch
      %25 = sbr.rel (%p23) target = $region8
    $region5: #{tpu_custom_call.1} parent=1 // loop_body
      %s27 = ssub.s32 %s22, 1
      %s28 = ssub.s32 %s22, 2
      %s35 = sadd.s32 1, %s30
      %p36 = scmp.ge.s32.totalorder %s35, 1
      %s37 = scalar_select %p36, 0, %s35
      %s38 = sadd.s32 1, %s29
      %s39 = scalar_select %p36, %s38, %s29
      %p40 = scmp.ge.s32.totalorder %s39, 2
      %s41 = scalar_select %p40, 0, %s39
      %s42 = ssub.s32 %s29, %s41
      %s43 = ssub.s32 %s30, %s37
      %s44 = sor.u32 %s42, %s43
      %p45 = scmp.eq.s32.totalorder %s44, 0
      %s47 = sadd.s32 %s46, 1
      %s48 = scalar_select %p45, %s46, %s47
      %p51 = pneg %p45
      %p52 = scmp.eq.s32.totalorder %s22, 1
      %p53 = por %p51, %p52
      %p54 = scmp.ne.s32.totalorder %s46, %s49
      %p55 = scmp.eq.s32.totalorder %s22, 0
      %p56 = por %p54, %p55
      %p57 = scmp.ne.s32.totalorder %s46, %s49
      %p58 = scmp.eq.s32.totalorder %s27, 1
      %p59 = por %p57, %p58
      %p60 = scmp.ne.s32.totalorder %s49, %s50
      %p61 = scmp.eq.s32.totalorder %s27, 0
      %p62 = por %p60, %p61
      %p63 = scmp.ne.s32.totalorder %s49, %s50
      %p64 = scmp.eq.s32.totalorder %s28, 1
      %p65 = por %p63, %p64
      %p67 = scmp.ne.s32.totalorder %s50, %s66
      %p68 = scmp.eq.s32.totalorder %s28, 0
      %p69 = por %p67, %p68
      %s71 = sadd.s32 %s70, 1
      %p74 = scmp.eq.s32.totalorder %s22, 1
      %p75 = scmp.ne.s32.totalorder %s70, %s72
      %p76 = scmp.eq.s32.totalorder %s22, 0
      %p77 = por %p75, %p76
      %p78 = scmp.ne.s32.totalorder %s70, %s72
      %p79 = scmp.eq.s32.totalorder %s27, 1
      %p80 = por %p78, %p79
      %p81 = scmp.ne.s32.totalorder %s72, %s73
      %p82 = scmp.eq.s32.totalorder %s27, 0
      %p83 = por %p81, %p82
      %p84 = scmp.ne.s32.totalorder %s72, %s73
      %p85 = scmp.eq.s32.totalorder %s28, 1
      %p86 = por %p84, %p85
      %p88 = scmp.ne.s32.totalorder %s73, %s87
      %p89 = scmp.eq.s32.totalorder %s28, 0
      %p90 = por %p88, %p89
      %s92 = sadd.s32 %s91, 1
      %p95 = scmp.eq.s32.totalorder %s22, 1
      %p96 = scmp.ne.s32.totalorder %s91, %s93
      %p97 = scmp.eq.s32.totalorder %s22, 0
      %p98 = por %p96, %p97
      %p99 = scmp.ne.s32.totalorder %s91, %s93
      %p100 = scmp.eq.s32.totalorder %s27, 1
      %p101 = por %p99, %p100
      %p102 = scmp.ne.s32.totalorder %s93, %s94
      %p103 = scmp.eq.s32.totalorder %s27, 0
      %p104 = por %p102, %p103
      %p105 = scmp.ne.s32.totalorder %s93, %s94
      %p106 = scmp.eq.s32.totalorder %s28, 1
      %p107 = por %p105, %p106
      %p109 = scmp.ne.s32.totalorder %s94, %s108
      %p110 = scmp.eq.s32.totalorder %s28, 0
      %p111 = por %p109, %p110
      %s113 = sadd.s32 %s112, 1
      %p116 = scmp.eq.s32.totalorder %s22, 1
      %p117 = scmp.ne.s32.totalorder %s112, %s114
      %p118 = scmp.eq.s32.totalorder %s22, 0
      %p119 = por %p117, %p118
      %p120 = scmp.ne.s32.totalorder %s112, %s114
      %p121 = scmp.eq.s32.totalorder %s27, 1
      %p122 = por %p120, %p121
      %p123 = scmp.ne.s32.totalorder %s114, %s115
      %p124 = scmp.eq.s32.totalorder %s27, 0
      %p125 = por %p123, %p124
      %p126 = scmp.ne.s32.totalorder %s114, %s115
      %p127 = scmp.eq.s32.totalorder %s28, 1
      %p128 = por %p126, %p127
      %p130 = scmp.ne.s32.totalorder %s115, %s129
      %p131 = scmp.eq.s32.totalorder %s28, 0
      %p132 = por %p130, %p131
      %s134 = sadd.s32 %s133, 1
      %p137 = scmp.eq.s32.totalorder %s22, 1
      %p138 = scmp.ne.s32.totalorder %s133, %s135
      %p139 = scmp.eq.s32.totalorder %s22, 0
      %p140 = por %p138, %p139
      %p141 = scmp.ne.s32.totalorder %s133, %s135
      %p142 = scmp.eq.s32.totalorder %s27, 1
      %p143 = por %p141, %p142
      %p144 = scmp.ne.s32.totalorder %s135, %s136
      %p145 = scmp.eq.s32.totalorder %s27, 0
      %p146 = por %p144, %p145
      %p147 = scmp.ne.s32.totalorder %s135, %s136
      %p148 = scmp.eq.s32.totalorder %s28, 1
      %p149 = por %p147, %p148
      %p151 = scmp.ne.s32.totalorder %s136, %s150
      %p152 = scmp.eq.s32.totalorder %s28, 0
      %p153 = por %p151, %p152
      %s155 = sadd.s32 %s154, 1
      %p158 = scmp.eq.s32.totalorder %s22, 1
      %p159 = scmp.ne.s32.totalorder %s154, %s156
      %p160 = scmp.eq.s32.totalorder %s22, 0
      %p161 = por %p159, %p160
      %p162 = scmp.ne.s32.totalorder %s154, %s156
      %p163 = scmp.eq.s32.totalorder %s27, 1
      %p164 = por %p162, %p163
      %p165 = scmp.ne.s32.totalorder %s156, %s157
      %p166 = scmp.eq.s32.totalorder %s27, 0
      %p167 = por %p165, %p166
      %p168 = scmp.ne.s32.totalorder %s156, %s157
      %p169 = scmp.eq.s32.totalorder %s28, 1
      %p170 = por %p168, %p169
      %p172 = scmp.ne.s32.totalorder %s157, %s171
      %p173 = scmp.eq.s32.totalorder %s28, 0
      %p174 = por %p172, %p173
      %s175 = ssub.s32 %s29, %s41
      %s176 = ssub.s32 %s30, %s37
      %s177 = sor.u32 %s175, %s176
      %p178 = scmp.eq.s32.totalorder %s177, 0
      %s180 = sadd.s32 %s179, 1
      %s181 = scalar_select %p178, %s179, %s180
      %p184 = pneg %p178
      %p185 = scmp.eq.s32.totalorder %s22, 1
      %p186 = por %p184, %p185
      %p187 = scmp.ne.s32.totalorder %s179, %s182
      %p188 = scmp.eq.s32.totalorder %s22, 0
      %p189 = por %p187, %p188
      %p190 = scmp.ne.s32.totalorder %s179, %s182
      %p191 = scmp.eq.s32.totalorder %s27, 1
      %p192 = por %p190, %p191
      %p193 = scmp.ne.s32.totalorder %s182, %s183
      %p194 = scmp.eq.s32.totalorder %s27, 0
      %p195 = por %p193, %p194
      %p196 = scmp.ne.s32.totalorder %s182, %s183
      %p197 = scmp.eq.s32.totalorder %s28, 1
      %p198 = por %p196, %p197
      %p200 = scmp.ne.s32.totalorder %s183, %s199
      %p201 = scmp.eq.s32.totalorder %s28, 0
      %p202 = por %p200, %p201
      %s203 = ssub.s32 %s29, %s41
      %s204 = ssub.s32 %s30, %s37
      %s205 = sor.u32 %s203, %s204
      %p206 = scmp.eq.s32.totalorder %s205, 0
      %s208 = sadd.s32 %s207, 1
      %s209 = scalar_select %p206, %s207, %s208
      %p212 = pneg %p206
      %p213 = scmp.eq.s32.totalorder %s22, 1
      %p214 = por %p212, %p213
      %p215 = scmp.ne.s32.totalorder %s207, %s210
      %p216 = scmp.eq.s32.totalorder %s22, 0
      %p217 = por %p215, %p216
      %p218 = scmp.ne.s32.totalorder %s207, %s210
      %p219 = scmp.eq.s32.totalorder %s27, 1
      %p220 = por %p218, %p219
      %p221 = scmp.ne.s32.totalorder %s210, %s211
      %p222 = scmp.eq.s32.totalorder %s27, 0
      %p223 = por %p221, %p222
      %p224 = scmp.ne.s32.totalorder %s210, %s211
      %p225 = scmp.eq.s32.totalorder %s28, 1
      %p226 = por %p224, %p225
      %p228 = scmp.ne.s32.totalorder %s211, %s227
      %p229 = scmp.eq.s32.totalorder %s28, 0
      %p230 = por %p228, %p229
      %p231 = scmp.le.s32.totalorder 1, %s22
      %p232 = scmp.lt.s32.totalorder %s22, 3
      %p233 = pnand %p231, %p232
      %p234 = pneg %p233
      // Predicated region
      $region9: #{tpu_custom_call.1} parent=5 // pred_check
        _
      $region10: #{tpu_custom_call.1} parent=5 // pred_check_branch
        %236 = sbr.rel (%p233) target = $region12
      $region11: #{tpu_custom_call.1} parent=5 // pred_region
        %s237 = ssub.s32 %s22, 1
        // Predicated region
        $region13: #{tpu_custom_call.1} parent=11 // pred_check
          %p238 = pneg %p83
        $region14: #{tpu_custom_call.1} parent=11 // pred_check_branch
          %240 = sbr.rel (%p238) target = $region16
        $region15: #{tpu_custom_call.1} parent=11 // pred_region
          %s242 = ssub.s32 256, 256
          %243 = vsyncadd [#allocation6], %s242
          %s244 = sshll.u32 [#allocation5], 4
          %s245 = int_to_ptr.vmem [resolvable:$true] %s244
          %250 = dma.hbm_to_vmem [thread:$0]  %s1, 256, %s245, [#allocation6], 64, 64, 4
        $region16: #{tpu_custom_call.1} parent=11 // pred_fallthru
          _
        // Predicated region
        $region17: #{tpu_custom_call.1} parent=11 // pred_check
          %p251 = pneg %p104
        $region18: #{tpu_custom_call.1} parent=11 // pred_check_branch
          %253 = sbr.rel (%p251) target = $region20
        $region19: #{tpu_custom_call.1} parent=11 // pred_region
          _
        $region20: #{tpu_custom_call.1} parent=11 // pred_fallthru
          _
        // Predicated region
        $region21: #{tpu_custom_call.1} parent=11 // pred_check
          %p254 = pneg %p125
        $region22: #{tpu_custom_call.1} parent=11 // pred_check_branch
          %256 = sbr.rel (%p254) target = $region24
        $region23: #{tpu_custom_call.1} parent=11 // pred_region
          %s258 = ssub.s32 1024, 1024
          %259 = vsyncadd [#allocation6], %s258
          %s260 = sshll.u32 [#allocation7], 4
          %s261 = int_to_ptr.vmem [resolvable:$true] %s260
          %266 = dma.hbm_to_vmem [thread:$0]  %s3, 1024, %s261, [#allocation6], 64, 64, 4
        $region24: #{tpu_custom_call.1} parent=11 // pred_fallthru
          _
        // Predicated region
        $region25: #{tpu_custom_call.1} parent=11 // pred_check
          %p267 = pneg %p146
        $region26: #{tpu_custom_call.1} parent=11 // pred_check_branch
          %269 = sbr.rel (%p267) target = $region28
        $region27: #{tpu_custom_call.1} parent=11 // pred_region
          %s271 = ssub.s32 256, 256
          %272 = vsyncadd [#allocation9], %s271
          %s273 = sshll.u32 [#allocation8], 4
          %s274 = int_to_ptr.vmem [resolvable:$true] %s273
          %279 = dma.hbm_to_vmem [thread:$0]  %s4, 256, %s274, [#allocation9], 64, 64, 4
        $region28: #{tpu_custom_call.1} parent=11 // pred_fallthru
          _
        // Predicated region
        $region29: #{tpu_custom_call.1} parent=11 // pred_check
          %p280 = pneg %p167
        $region30: #{tpu_custom_call.1} parent=11 // pred_check_branch
          %282 = sbr.rel (%p280) target = $region32
        $region31: #{tpu_custom_call.1} parent=11 // pred_region
          _
        $region32: #{tpu_custom_call.1} parent=11 // pred_fallthru
          _
      $region12: #{tpu_custom_call.1} parent=5 // pred_fallthru
        _
      %p283 = scmp.lt.s32.totalorder %s22, 2
      // Predicated region
      $region33: #{tpu_custom_call.1} parent=5 // pred_check
        %p284 = pneg %p283
      $region34: #{tpu_custom_call.1} parent=5 // pred_check_branch
        %286 = sbr.rel (%p284) target = $region36
      $region35: #{tpu_custom_call.1} parent=5 // pred_region
        // Predicated region
        $region37: #{tpu_custom_call.1} parent=35 // pred_check
          %p287 = pneg %p56
        $region38: #{tpu_custom_call.1} parent=35 // pred_check_branch
          %289 = sbr.rel (%p287) target = $region40
        $region39: #{tpu_custom_call.1} parent=35 // pred_region
          %s290 = sand.u32 %s46, 1
          %s291 = scalar_lea.sflag [#allocation3], %s290
          %s292 = sand.u32 %s46, 1
          %s293 = smul.addr %s292, 8
          %s294 = scalar_lea.vmem [#allocation2], %s293
          %s296 = ssub.s32 128, 128
          %297 = vsyncadd %s291, %s296
          %s298 = sadd.s32 %s30, %s29
          %s299 = smul.addr %s298, 128
          %s300 = scalar_lea.hbm %s0, %s299
          %s302 = sshll.u32 %s294, 4
          %s303 = int_to_ptr.vmem [resolvable:$true] %s302
          %305 = dma.hbm_to_vmem [thread:$0]  %s300, 128, %s303, %s291
        $region40: #{tpu_custom_call.1} parent=35 // pred_fallthru
          _
      $region36: #{tpu_custom_call.1} parent=5 // pred_fallthru
        _
      %p306 = scmp.le.s32.totalorder 1, %s22
      %p307 = scmp.lt.s32.totalorder %s22, 3
      %p308 = pnand %p306, %p307
      %p309 = pneg %p308
      // Predicated region
      $region41: #{tpu_custom_call.1} parent=5 // pred_check
        _
      $region42: #{tpu_custom_call.1} parent=5 // pred_check_branch
        %311 = sbr.rel (%p308) target = $region44
      $region43: #{tpu_custom_call.1} parent=5 // pred_region
        %s312 = ssub.s32 %s22, 1
        %s313 = sand.u32 %s49, 1
        %s314 = scalar_lea.sflag [#allocation3], %s313
        %s315 = sand.u32 %s49, 1
        %s316 = smul.addr %s315, 8
        %s317 = scalar_lea.vmem [#allocation2], %s316
        // Predicated region
        $region45: #{tpu_custom_call.1} parent=43 // pred_check
          %p318 = pneg %p62
        $region46: #{tpu_custom_call.1} parent=43 // pred_check_branch
          %320 = sbr.rel (%p318) target = $region48
        $region47: #{tpu_custom_call.1} parent=43 // pred_region
          %321 = dma.done %s314, 128
        $region48: #{tpu_custom_call.1} parent=43 // pred_fallthru
          _
        // Predicated region
        $region49: #{tpu_custom_call.1} parent=43 // pred_check
          %p322 = pneg %p83
        $region50: #{tpu_custom_call.1} parent=43 // pred_check_branch
          %324 = sbr.rel (%p322) target = $region52
        $region51: #{tpu_custom_call.1} parent=43 // pred_region
          %325 = dma.done [#allocation6], 256
        $region52: #{tpu_custom_call.1} parent=43 // pred_fallthru
          _
        // Predicated region
        $region53: #{tpu_custom_call.1} parent=43 // pred_check
          %p326 = pneg %p125
        $region54: #{tpu_custom_call.1} parent=43 // pred_check_branch
          %328 = sbr.rel (%p326) target = $region56
        $region55: #{tpu_custom_call.1} parent=43 // pred_region
          %329 = dma.done [#allocation6], 1024
        $region56: #{tpu_custom_call.1} parent=43 // pred_fallthru
          _
        // Predicated region
        $region57: #{tpu_custom_call.1} parent=43 // pred_check
          %p330 = pneg %p146
        $region58: #{tpu_custom_call.1} parent=43 // pred_check_branch
          %332 = sbr.rel (%p330) target = $region60
        $region59: #{tpu_custom_call.1} parent=43 // pred_region
          %333 = dma.done [#allocation9], 256
        $region60: #{tpu_custom_call.1} parent=43 // pred_fallthru
          _
        %s334 = sand.u32 %s49, 1
        %s335 = scalar_lea.sflag [#allocation3], %s334
        %s336 = sand.u32 %s49, 1
        %s337 = smul.addr %s336, 8
        %s338 = scalar_lea.vmem [#allocation2], %s337
        %p339 = pneg %p62
        %p340 = pneg %p59
        %p341 = pneg %p83
        %p342 = pneg %p80
        %p343 = pneg %p104
        %p344 = pneg %p101
        %p345 = pneg %p125
        %p346 = pneg %p122
        %p347 = pneg %p146
        %p348 = pneg %p143
        %p349 = pneg %p167
        %p350 = pneg %p164
        %p351 = pneg %p195
        %p352 = pneg %p192
        %p353 = scmp.lt.s32.totalorder %s31, 1
        %s354 = scalar_select %p353, %s31, 1
        %p355 = scmp.lt.s32.totalorder %s32, 0
        %s356 = scalar_select %p355, %s32, 0
        %s357 = smul.addr %s354, 16
        %s358 = sadd.s32 %s356, %s357
        %s359 = smul.addr %s358, 4
        %s360 = scalar_lea.vmem %s6, %s359
        %p361 = pneg %p223
        %p362 = pneg %p220
        %s363 = sand.u32 %s210, 1
        %s364 = scalar_lea.sflag [#allocation4], %s363
        %s365 = sand.u32 %s210, 1
        %s366 = smul.addr %s365, 4
        %s367 = scalar_lea.vmem [#allocation10], %s366
        %p368 = scmp.lt.s32.totalorder %s31, 1
        %s369 = scalar_select %p368, %s31, 1
        %p370 = scmp.lt.s32.totalorder %s32, 0
        %s371 = scalar_select %p370, %s32, 0
        %s372 = smul.addr %s369, 16
        %s373 = sadd.s32 %s371, %s372
        %s374 = smul.addr %s373, 4
        %s375 = scalar_lea.vmem %s6, %s374
        %v377 = vld [vmem:[%s317] sm:$0xff]
        %v378 = vpack.c.bf16 %v377, %v377
        %v379 = vld [vmem:[#allocation5] sm:$0xf]
        %v380 = vld [vmem:[#allocation5 + $0x4] sm:$0xf]
        %v381 = vld [vmem:[#allocation5 + $0x8] sm:$0xf]
        %v382 = vld [vmem:[#allocation5 + $0xc] sm:$0xf]
        %v383 = vld [vmem:[%s2] sm:$0x1]
        %v385 = vlaneseq
        %v386 = vshrl.u32 %v385, 7
        %v387 = vsub.s32 0, %v386
        %v388 = vrot.slane %v383, %v387
        %v394 = vunpack.c.l.b16 %v379
        %v395 = vunpack.c.l.b16 %v380
        %v396 = vunpack.c.l.b16 %v381
        %v397 = vunpack.c.l.b16 %v382
        %v398 = vpack.c.b16 %v395, %v394
        %v399 = vpack.c.b16 %v397, %v396
        %vm402 = vcmask 261120
        %v404 = vsel %vm402, %v378, 0
        %406 = vmatprep.subr.bf16.mxu0 0
        %407 = vmatpush1.bf16.msra.mxu0 %v398
        %408 = vmatprep.subr.bf16.mxu0 0
        %409 = vmatpush1.bf16.msra.mxu0 %v399
        %410 = vmatprep.subr.bf16.mxu0 0
        %411 = vmatpush1.bf16.msra.mxu0 0
        %412 = vmatprep.subr.bf16.mxu0 0
        %413 = vmatpush1.bf16.msra.mxu0 0
        %414 = vmatprep.subr.bf16.mxu0 0
        %415 = vmatpush1.bf16.msra.mxu0 0
        %416 = vmatprep.subr.bf16.mxu0 0
        %417 = vmatpush1.bf16.msra.mxu0 0
        %418 = vmatprep.subr.bf16.mxu0 0
        %419 = vmatpush1.bf16.msra.mxu0 0
        %420 = vmatprep.subr.bf16.mxu0 0
        %421 = vmatpush1.bf16.msra.mxu0 0
        %422 = vmatprep.subr.bf16.mxu0 0
        %423 = vmatpush1.bf16.msra.mxu0 0
        %424 = vmatprep.subr.bf16.mxu0 0
        %425 = vmatpush1.bf16.msra.mxu0 0
        %426 = vmatprep.subr.bf16.mxu0 0
        %427 = vmatpush1.bf16.msra.mxu0 0
        %428 = vmatprep.subr.bf16.mxu0 0
        %429 = vmatpush1.bf16.msra.mxu0 0
        %430 = vmatprep.subr.bf16.mxu0 0
        %431 = vmatpush1.bf16.msra.mxu0 0
        %432 = vmatprep.subr.bf16.mxu0 0
        %433 = vmatpush1.bf16.msra.mxu0 0
        %434 = vmatprep.subr.bf16.mxu0 0
        %435 = vmatpush1.bf16.msra.mxu0 0
        %436 = vmatprep.subr.bf16.mxu0 0
        %437 = vmatpush1.bf16.msra.mxu0 0
        %438 = vmatprep.mubr.bf16.mxu0 0
        %439 = vmatmul.mubr.bf16.gmra.mrb[0].mxu0 %v404
        %v440 = vpop.f32.mrb[0].mxu0
        %v441 = vadd.f32 %v388, %v440
        %v442 = vpop.f32.mrb[0].mxu0
        %v443 = vpop.f32.mrb[0].mxu0
        %v444 = vpop.f32.mrb[0].mxu0
        %445 = vdwg.mxu0
        %v446 = vmax.f32 %v441, 0.0
        %v447 = vld [vmem:[#allocation7] sm:$0xf]
        %v448 = vld [vmem:[#allocation7 + $0x4] sm:$0xf]
        %v449 = vld [vmem:[#allocation7 + $0x8] sm:$0xf]
        %v450 = vld [vmem:[#allocation7 + $0xc] sm:$0xf]
        %v451 = vld [vmem:[#allocation7 + $0x10] sm:$0xf]
        %v452 = vld [vmem:[#allocation7 + $0x14] sm:$0xf]
        %v453 = vld [vmem:[#allocation7 + $0x18] sm:$0xf]
        %v454 = vld [vmem:[#allocation7 + $0x1c] sm:$0xf]
        %v455 = vld [vmem:[#allocation7 + $0x20] sm:$0xf]
        %v456 = vld [vmem:[#allocation7 + $0x24] sm:$0xf]
        %v457 = vld [vmem:[#allocation7 + $0x28] sm:$0xf]
        %v458 = vld [vmem:[#allocation7 + $0x2c] sm:$0xf]
        %v459 = vld [vmem:[#allocation7 + $0x30] sm:$0xf]
        %v460 = vld [vmem:[#allocation7 + $0x34] sm:$0xf]
        %v461 = vld [vmem:[#allocation7 + $0x38] sm:$0xf]
        %v462 = vld [vmem:[#allocation7 + $0x3c] sm:$0xf]
        %v463 = vpack.c.bf16 %v446, %v446
        %v480 = vunpack.c.l.b16 %v447
        %v481 = vunpack.c.l.b16 %v448
        %v482 = vunpack.c.l.b16 %v449
        %v483 = vunpack.c.l.b16 %v450
        %v484 = vunpack.c.l.b16 %v451
        %v485 = vunpack.c.l.b16 %v452
        %v486 = vunpack.c.l.b16 %v453
        %v487 = vunpack.c.l.b16 %v454
        %v488 = vunpack.c.l.b16 %v455
        %v489 = vunpack.c.l.b16 %v456
        %v490 = vunpack.c.l.b16 %v457
        %v491 = vunpack.c.l.b16 %v458
        %v492 = vunpack.c.l.b16 %v459
        %v493 = vunpack.c.l.b16 %v460
        %v494 = vunpack.c.l.b16 %v461
        %v495 = vunpack.c.l.b16 %v462
        %v496 = vpack.c.b16 %v481, %v480
        %v497 = vpack.c.b16 %v483, %v482
        %v498 = vpack.c.b16 %v485, %v484
        %v499 = vpack.c.b16 %v487, %v486
        %v500 = vpack.c.b16 %v489, %v488
        %v501 = vpack.c.b16 %v491, %v490
        %v502 = vpack.c.b16 %v493, %v492
        %v503 = vpack.c.b16 %v495, %v494
        %512 = vmatprep.subr.bf16.mxu0 0
        %513 = vmatpush1.bf16.xpose.msra.mxu0 %v463
        %514 = vmatprep.subr.bf16.mxu0 0
        %515 = vmatpush1.bf16.xpose.msra.mxu0 0
        %516 = vmatprep.subr.bf16.mxu0 0
        %517 = vmatpush1.bf16.xpose.msra.mxu0 0
        %518 = vmatprep.subr.bf16.mxu0 0
        %519 = vmatpush1.bf16.xpose.msra.mxu0 0
        %520 = vmatprep.subr.bf16.mxu0 0
        %521 = vmatpush1.bf16.xpose.msra.mxu0 0
        %522 = vmatprep.subr.bf16.mxu0 0
        %523 = vmatpush1.bf16.xpose.msra.mxu0 0
        %524 = vmatprep.subr.bf16.mxu0 0
        %525 = vmatpush1.bf16.xpose.msra.mxu0 0
        %526 = vmatprep.subr.bf16.mxu0 0
        %527 = vmatpush1.bf16.xpose.msra.mxu0 0
        %528 = vmatprep.subr.bf16.mxu0 0
        %529 = vmatpush1.bf16.xpose.msra.mxu0 0
        %530 = vmatprep.subr.bf16.mxu0 0
        %531 = vmatpush1.bf16.xpose.msra.mxu0 0
        %532 = vmatprep.subr.bf16.mxu0 0
        %533 = vmatpush1.bf16.xpose.msra.mxu0 0
        %534 = vmatprep.subr.bf16.mxu0 0
        %535 = vmatpush1.bf16.xpose.msra.mxu0 0
        %536 = vmatprep.subr.bf16.mxu0 0
        %537 = vmatpush1.bf16.xpose.msra.mxu0 0
        %538 = vmatprep.subr.bf16.mxu0 0
        %539 = vmatpush1.bf16.xpose.msra.mxu0 0
        %540 = vmatprep.subr.bf16.mxu0 0
        %541 = vmatpush1.bf16.xpose.msra.mxu0 0
        %542 = vmatprep.subr.bf16.mxu0 0
        %543 = vmatpush1.bf16.xpose.msra.mxu0 0
        %544 = vmatprep.mubr.bf16.mxu0 0
        %545 = vmatmul.mubr.bf16.gmra.mrb[0].mxu0 %v496
        %v546 = vpop.f32.mrb[0].mxu0
        %v547 = vadd.f32 0.0, %v546
        %v548 = vpop.f32.mrb[0].mxu0
        %v549 = vpop.f32.mrb[0].mxu0
        %v550 = vadd.f32 0.0, %v549
        %v551 = vpop.f32.mrb[0].mxu0
        %552 = vmatprep.mubr.bf16.mxu0 0
        %553 = vmatmul.mubr.bf16.gmra.mrb[0].mxu0 %v497
        %v554 = vpop.f32.mrb[0].mxu0
        %v555 = vadd.f32 0.0, %v554
        %v556 = vpop.f32.mrb[0].mxu0
        %v557 = vpop.f32.mrb[0].mxu0
        %v558 = vadd.f32 0.0, %v557
        %v559 = vpop.f32.mrb[0].mxu0
        %560 = vmatprep.mubr.bf16.mxu0 0
        %561 = vmatmul.mubr.bf16.gmra.mrb[0].mxu0 %v498
        %v562 = vpop.f32.mrb[0].mxu0
        %v563 = vadd.f32 0.0, %v562
        %v564 = vpop.f32.mrb[0].mxu0
        %v565 = vpop.f32.mrb[0].mxu0
        %v566 = vadd.f32 0.0, %v565
        %v567 = vpop.f32.mrb[0].mxu0
        %568 = vmatprep.mubr.bf16.mxu0 0
        %569 = vmatmul.mubr.bf16.gmra.mrb[0].mxu0 %v499
        %v570 = vpop.f32.mrb[0].mxu0
        %v571 = vadd.f32 0.0, %v570
        %v572 = vpop.f32.mrb[0].mxu0
        %v573 = vpop.f32.mrb[0].mxu0
        %v574 = vadd.f32 0.0, %v573
        %v575 = vpop.f32.mrb[0].mxu0
        %576 = vmatprep.mubr.bf16.mxu0 0
        %577 = vmatmul.mubr.bf16.gmra.mrb[0].mxu0 %v500
        %v578 = vpop.f32.mrb[0].mxu0
        %v579 = vadd.f32 0.0, %v578
        %v580 = vpop.f32.mrb[0].mxu0
        %v581 = vpop.f32.mrb[0].mxu0
        %v582 = vadd.f32 0.0, %v581
        %v583 = vpop.f32.mrb[0].mxu0
        %584 = vmatprep.mubr.bf16.mxu0 0
        %585 = vmatmul.mubr.bf16.gmra.mrb[0].mxu0 %v501
        %v586 = vpop.f32.mrb[0].mxu0
        %v587 = vadd.f32 0.0, %v586
        %v588 = vpop.f32.mrb[0].mxu0
        %v589 = vpop.f32.mrb[0].mxu0
        %v590 = vadd.f32 0.0, %v589
        %v591 = vpop.f32.mrb[0].mxu0
        %592 = vmatprep.mubr.bf16.mxu0 0
        %593 = vmatmul.mubr.bf16.gmra.mrb[0].mxu0 %v502
        %v594 = vpop.f32.mrb[0].mxu0
        %v595 = vadd.f32 0.0, %v594
        %v596 = vpop.f32.mrb[0].mxu0
        %v597 = vpop.f32.mrb[0].mxu0
        %v598 = vadd.f32 0.0, %v597
        %v599 = vpop.f32.mrb[0].mxu0
        %600 = vmatprep.mubr.bf16.mxu0 0
        %601 = vmatmul.mubr.bf16.gmra.mrb[0].mxu0 %v503
        %v602 = vpop.f32.mrb[0].mxu0
        %v603 = vadd.f32 0.0, %v602
        %v604 = vpop.f32.mrb[0].mxu0
        %v605 = vpop.f32.mrb[0].mxu0
        %v606 = vadd.f32 0.0, %v605
        %v607 = vpop.f32.mrb[0].mxu0
        %608 = vdwg.mxu0
        %v609 = vpack.c.bf16 %v550, %v547
        %v610 = vpack.c.bf16 %v558, %v555
        %v611 = vpack.c.bf16 %v566, %v563
        %v612 = vpack.c.bf16 %v574, %v571
        %v613 = vpack.c.bf16 %v582, %v579
        %v614 = vpack.c.bf16 %v590, %v587
        %v615 = vpack.c.bf16 %v598, %v595
        %v616 = vpack.c.bf16 %v606, %v603
        %v625 = vunpack.c.l.b16 %v609
        %v626 = vunpack.c.h.b16 %v609
        %v627 = vunpack.c.l.b16 %v610
        %v628 = vunpack.c.h.b16 %v610
        %v629 = vunpack.c.l.b16 %v611
        %v630 = vunpack.c.h.b16 %v611
        %v631 = vunpack.c.l.b16 %v612
        %v632 = vunpack.c.h.b16 %v612
        %v633 = vunpack.c.l.b16 %v613
        %v634 = vunpack.c.h.b16 %v613
        %v635 = vunpack.c.l.b16 %v614
        %v636 = vunpack.c.h.b16 %v614
        %v637 = vunpack.c.l.b16 %v615
        %v638 = vunpack.c.h.b16 %v615
        %v639 = vunpack.c.l.b16 %v616
        %v640 = vunpack.c.h.b16 %v616
        %v641 = vpack.c.b16 %v625, %v625
        %v642 = vpack.c.b16 %v626, %v626
        %v643 = vpack.c.b16 %v627, %v627
        %v644 = vpack.c.b16 %v628, %v628
        %v645 = vpack.c.b16 %v629, %v629
        %v646 = vpack.c.b16 %v630, %v630
        %v647 = vpack.c.b16 %v631, %v631
        %v648 = vpack.c.b16 %v632, %v632
        %v649 = vpack.c.b16 %v633, %v633
        %v650 = vpack.c.b16 %v634, %v634
        %v651 = vpack.c.b16 %v635, %v635
        %v652 = vpack.c.b16 %v636, %v636
        %v653 = vpack.c.b16 %v637, %v637
        %v654 = vpack.c.b16 %v638, %v638
        %v655 = vpack.c.b16 %v639, %v639
        %v656 = vpack.c.b16 %v640, %v640
        %vm673 = vcmask 60416
        %674 = vst.msk [vmem:[%s375] sm:$0xf] %vm673, %v641
        %675 = vst.msk [vmem:[%s375 + $0x4] sm:$0xf] %vm673, %v642
        %676 = vst.msk [vmem:[%s375 + $0x8] sm:$0xf] %vm673, %v643
        %677 = vst.msk [vmem:[%s375 + $0xc] sm:$0xf] %vm673, %v644
        %678 = vst.msk [vmem:[%s375 + $0x10] sm:$0xf] %vm673, %v645
        %679 = vst.msk [vmem:[%s375 + $0x14] sm:$0xf] %vm673, %v646
        %680 = vst.msk [vmem:[%s375 + $0x18] sm:$0xf] %vm673, %v647
        %681 = vst.msk [vmem:[%s375 + $0x1c] sm:$0xf] %vm673, %v648
        %682 = vst.msk [vmem:[%s375 + $0x20] sm:$0xf] %vm673, %v649
        %683 = vst.msk [vmem:[%s375 + $0x24] sm:$0xf] %vm673, %v650
        %684 = vst.msk [vmem:[%s375 + $0x28] sm:$0xf] %vm673, %v651
        %685 = vst.msk [vmem:[%s375 + $0x2c] sm:$0xf] %vm673, %v652
        %686 = vst.msk [vmem:[%s375 + $0x30] sm:$0xf] %vm673, %v653
        %687 = vst.msk [vmem:[%s375 + $0x34] sm:$0xf] %vm673, %v654
        %688 = vst.msk [vmem:[%s375 + $0x38] sm:$0xf] %vm673, %v655
        %689 = vst.msk [vmem:[%s375 + $0x3c] sm:$0xf] %vm673, %v656
        %v690 = vld [vmem:[#allocation8] sm:$0xf]
        %v691 = vld [vmem:[#allocation8 + $0x4] sm:$0xf]
        %v692 = vld [vmem:[#allocation8 + $0x8] sm:$0xf]
        %v693 = vld [vmem:[#allocation8 + $0xc] sm:$0xf]
        %v694 = vld [vmem:[%s5] sm:$0x1]
        %v696 = vlaneseq
        %v697 = vshrl.u32 %v696, 7
        %v698 = vsub.s32 0, %v697
        %v699 = vrot.slane %v694, %v698
        %v705 = vunpack.c.l.b16 %v690
        %v706 = vunpack.c.l.b16 %v691
        %v707 = vunpack.c.l.b16 %v692
        %v708 = vunpack.c.l.b16 %v693
        %v709 = vpack.c.b16 %v706, %v705
        %v710 = vpack.c.b16 %v708, %v707
        %713 = vmatprep.subr.bf16.mxu0 0
        %714 = vmatpush1.bf16.msra.mxu0 %v709
        %715 = vmatprep.subr.bf16.mxu0 0
        %716 = vmatpush1.bf16.msra.mxu0 %v710
        %717 = vmatprep.subr.bf16.mxu0 0
        %718 = vmatpush1.bf16.msra.mxu0 0
        %719 = vmatprep.subr.bf16.mxu0 0
        %720 = vmatpush1.bf16.msra.mxu0 0
        %721 = vmatprep.subr.bf16.mxu0 0
        %722 = vmatpush1.bf16.msra.mxu0 0
        %723 = vmatprep.subr.bf16.mxu0 0
        %724 = vmatpush1.bf16.msra.mxu0 0
        %725 = vmatprep.subr.bf16.mxu0 0
        %726 = vmatpush1.bf16.msra.mxu0 0
        %727 = vmatprep.subr.bf16.mxu0 0
        %728 = vmatpush1.bf16.msra.mxu0 0
        %729 = vmatprep.subr.bf16.mxu0 0
        %730 = vmatpush1.bf16.msra.mxu0 0
        %731 = vmatprep.subr.bf16.mxu0 0
        %732 = vmatpush1.bf16.msra.mxu0 0
        %733 = vmatprep.subr.bf16.mxu0 0
        %734 = vmatpush1.bf16.msra.mxu0 0
        %735 = vmatprep.subr.bf16.mxu0 0
        %736 = vmatpush1.bf16.msra.mxu0 0
        %737 = vmatprep.subr.bf16.mxu0 0
        %738 = vmatpush1.bf16.msra.mxu0 0
        %739 = vmatprep.subr.bf16.mxu0 0
        %740 = vmatpush1.bf16.msra.mxu0 0
        %741 = vmatprep.subr.bf16.mxu0 0
        %742 = vmatpush1.bf16.msra.mxu0 0
        %743 = vmatprep.subr.bf16.mxu0 0
        %744 = vmatpush1.bf16.msra.mxu0 0
        %745 = vmatprep.mubr.bf16.mxu0 0
        %746 = vmatmul.mubr.bf16.gmra.mrb[0].mxu0 %v404
        %v747 = vpop.f32.mrb[0].mxu0
        %v748 = vadd.f32 %v699, %v747
        %v749 = vpop.f32.mrb[0].mxu0
        %v750 = vpop.f32.mrb[0].mxu0
        %v751 = vpop.f32.mrb[0].mxu0
        %752 = vdwg.mxu0
        %v753 = vmax.f32 %v748, 0.0
        %v754 = vpack.c.bf16 %v753, %v753
        %755 = vst [vmem:[%s367] sm:$0xf] %v754
        %p756 = scmp.lt.s32.totalorder %s31, 1
        %s757 = scalar_select %p756, %s31, 1
        %p758 = scmp.lt.s32.totalorder %s32, 0
        %s759 = scalar_select %p758, %s32, 0
        %s760 = smul.addr %s757, 16
        %s761 = sadd.s32 %s759, %s760
        %s762 = smul.addr %s761, 4
        %s763 = scalar_lea.vmem %s6, %s762
        %s764 = sand.u32 %s210, 1
        %s765 = scalar_lea.sflag [#allocation4], %s764
        %s766 = sand.u32 %s210, 1
        %s767 = smul.addr %s766, 4
        %s768 = scalar_lea.vmem [#allocation10], %s767
        // Predicated region
        $region61: #{tpu_custom_call.1} parent=43 // pred_check
          %p769 = pneg %p192
        $region62: #{tpu_custom_call.1} parent=43 // pred_check_branch
          %771 = sbr.rel (%p769) target = $region64
        $region63: #{tpu_custom_call.1} parent=43 // pred_region
          _
        $region64: #{tpu_custom_call.1} parent=43 // pred_fallthru
          _
        // Predicated region
        $region65: #{tpu_custom_call.1} parent=43 // pred_check
          %p772 = pneg %p220
        $region66: #{tpu_custom_call.1} parent=43 // pred_check_branch
          %774 = sbr.rel (%p772) target = $region68
        $region67: #{tpu_custom_call.1} parent=43 // pred_region
          %s776 = ssub.s32 64, 64
          %777 = vsyncadd %s765, %s776
          %s778 = sadd.s32 %s32, %s31
          %s779 = smul.addr %s778, 64
          %s780 = scalar_lea.hbm %s7, %s779
          %s782 = sshll.u32 %s768, 4
          %s783 = int_to_ptr.vmem [resolvable:$true] %s782
          %785 = dma.vmem_to_hbm [thread:$0]  %s783, 64, %s780, %s765
        $region68: #{tpu_custom_call.1} parent=43 // pred_fallthru
          _
      $region44: #{tpu_custom_call.1} parent=5 // pred_fallthru
        _
      %p786 = scmp.le.s32.totalorder 2, %s22
      // Predicated region
      $region69: #{tpu_custom_call.1} parent=5 // pred_check
        %p787 = pneg %p786
      $region70: #{tpu_custom_call.1} parent=5 // pred_check_branch
        %789 = sbr.rel (%p787) target = $region72
      $region71: #{tpu_custom_call.1} parent=5 // pred_region
        %s790 = ssub.s32 %s22, 2
        // Predicated region
        $region73: #{tpu_custom_call.1} parent=71 // pred_check
          %p791 = pneg %p198
        $region74: #{tpu_custom_call.1} parent=71 // pred_check_branch
          %793 = sbr.rel (%p791) target = $region76
        $region75: #{tpu_custom_call.1} parent=71 // pred_region
          %p794 = scmp.lt.s32.totalorder %s33, 1
          %s795 = scalar_select %p794, %s33, 1
          %p796 = scmp.lt.s32.totalorder %s34, 0
          %s797 = scalar_select %p796, %s34, 0
          %s798 = smul.addr %s795, 16
          %s799 = sadd.s32 %s797, %s798
          %s800 = smul.addr %s799, 4
          %s801 = scalar_lea.vmem %s6, %s800
        $region76: #{tpu_custom_call.1} parent=71 // pred_fallthru
          _
        // Predicated region
        $region77: #{tpu_custom_call.1} parent=71 // pred_check
          %p802 = pneg %p226
        $region78: #{tpu_custom_call.1} parent=71 // pred_check_branch
          %804 = sbr.rel (%p802) target = $region80
        $region79: #{tpu_custom_call.1} parent=71 // pred_region
          %s805 = sand.u32 %s211, 1
          %s806 = scalar_lea.sflag [#allocation4], %s805
          %s807 = sand.u32 %s211, 1
          %s808 = smul.addr %s807, 4
          %s809 = scalar_lea.vmem [#allocation10], %s808
          %810 = dma.done %s806, 64
        $region80: #{tpu_custom_call.1} parent=71 // pred_fallthru
          _
      $region72: #{tpu_custom_call.1} parent=5 // pred_fallthru
        _
    $region6: #{tpu_custom_call.1} parent=1 // loop_footer
      %s26 = sadd.s32 1, %s22
    $region7: #{tpu_custom_call.1} parent=1 // loop_footer_branch
      %21 = sbr.rel target = $region3
    $region8: #{tpu_custom_call.1} parent=1 // loop_exit
      _
    %811 = vsyncpa [#allocation3], 1
    %s812 = scalar_lea.sflag [#allocation3], 1
    %813 = vsyncpa %s812, 1
    %814 = vsyncpa [#allocation6], 1
    %815 = vsyncpa [#allocation9], 1
    %816 = vsyncpa [#allocation4], 1
    %s817 = scalar_lea.sflag [#allocation4], 1
    %818 = vsyncpa %s817, 1

</llo_original>
